<compile_context>
chip_gen: v7x
topology: tpu7x:2x2x1
jax: 0.10.0
libtpu: 0.0.40
codegen_flags: <defaults>
</compile_context>

<pallas_src>
import math

import jax
import jax.numpy as jnp
from jax import lax
from jax.experimental import pallas as pl
from jax.experimental.pallas import tpu as pltpu


def _round_up(x, m):
    return (x + m - 1) // m * m


def _lane_pad(n):
    return _round_up(max(int(n), 1), 128)


def _embedder_kernel(x_ref, w_ref, o_ref):
    # One MXU matmul per (row-tile, col-tile) grid step.  The weight always
    # contracts on dim 0 (pre-transposed / block-diagonal at init time), so no
    # in-kernel transpose; accumulation is f32 regardless of I/O dtype.
    o_ref[...] = lax.dot_general(
        x_ref[...],
        w_ref[...],
        dimension_numbers=(((1,), (0,)), ((), ())),
        preferred_element_type=jnp.float32,
        precision=lax.Precision.HIGHEST,
    ).astype(o_ref.dtype)


def prepare_embedder_weight(weight, n_rows, *, compute_dtype=None,
                            max_group_weight_bytes=2 << 20):
    """One-time (parameter-init time) weight preprocessing.

    weight : [d_model, in_channels]  (PyTorch nn.Linear layout)
    n_rows : number of tokens (batch * seq_len) the forward will process; the
             lane-dense grouping factor G is picked to divide it exactly so
             the forward never has to pad/copy the activation in HBM.
    """
    D, C = weight.shape
    dtype = jnp.dtype(compute_dtype) if compute_dtype is not None else jnp.dtype(weight.dtype)
    itemsize = dtype.itemsize

    # Lane-dense grouping: pack G logical rows into one physical row so both
    # the x block (G*C lanes) and the out block (G*D lanes) are 128-lane dense.
    def g_for(n):
        return 128 // math.gcd(128, int(n))

    ga, gb = g_for(C), g_for(D)
    g = ga * gb // math.gcd(ga, gb)                 # lcm (always a power of two)
    # Keep the (mostly-zero) block-diagonal weight small.
    while g > 1 and g * g * C * D * itemsize > max_group_weight_bytes:
        g //= 2
    # Require G | n_rows so the forward never pads the activation.
    G = max(int(math.gcd(g, int(n_rows))) if n_rows else int(g), 1)

    w = weight.astype(dtype)
    if G > 1:
        # Block-diagonal [G*C, G*D] with W.T on the diagonal:
        #   (row-major regrouped x) @ w_kernel == x @ W.T   (regrouped).
        w_kernel = jnp.kron(jnp.eye(G, dtype=dtype), w.T)
    else:
        w_kernel = w.T                              # (C, D): contract dim 0 in-kernel
    return {"w": w_kernel, "G": G, "C": int(C), "D": int(D), "dtype": dtype}


def embedder_forward(src, params, *, vmem_budget_bytes=None):
    """src: [B, S, C] -> [B, S, D]  (== src @ W.T, no bias)."""
    B, S, C_in = src.shape
    G, C, D = params["G"], params["C"], params["D"]
    dtype = params["dtype"]
    w_kernel = params["w"]
    assert C_in == C, f"in_channels mismatch: {C_in} vs {C}"
    itemsize = dtype.itemsize

    M = B * S
    assert M % G == 0, "prepare_embedder_weight must be called with n_rows = B*S"
    out_rows, x_cols, out_cols = M // G, G * C, G * D

    x2d = src.reshape(M, C)
    if x2d.dtype != dtype:
        x2d = x2d.astype(dtype)                      # only when bf16 compute is opted in
    x_kernel = x2d.reshape(out_rows, x_cols)         # free row-major regroup in HBM

    # ---- per-generation VMEM budget (physical, lane/sublane-padded bytes) ----
    try:
        vmem_cap = int(pltpu.get_tpu_info().vmem_capacity_bytes)
    except Exception:
        vmem_cap = 64 << 20                          # conservative (v7x-sized) fallback
    if vmem_budget_bytes is None:
        vmem_budget_bytes = vmem_cap // 2            # ~64 MiB v5e/v6e, ~32 MiB v7x

    sublane = 16 if itemsize == 2 else 8
    align = sublane

    def w_phys_bytes(cols):
        return _round_up(x_cols, sublane) * _lane_pad(cols) * itemsize

    # Column (weight) tiling only if the full weight would not comfortably
    # co-reside with large row tiles (guards v7x's 64 MiB VMEM).
    if out_cols <= 1024 or 2 * w_phys_bytes(out_cols) <= vmem_budget_bytes // 4:
        tn = out_cols
    else:
        tn = 1024
    n_j = int(pl.cdiv(out_cols, tn))
    w_bytes = 2 * w_phys_bytes(tn)                   # assume double-buffered weight

    x_row_bytes = _lane_pad(x_cols) * itemsize
    o_row_bytes = _lane_pad(tn) * itemsize
    avail = max(vmem_budget_bytes - w_bytes, 1 << 20)
    rows_cap = avail // (2 * (x_row_bytes + o_row_bytes))   # 2 pipeline buffers each
    tm = max(align, (rows_cap // align) * align)
    if tm >= out_rows:
        tm = out_rows                                # single full-extent block is legal
    n_i = int(pl.cdiv(out_rows, tm))

    # Give v7x's two TensorCores >= 2 roughly even row steps whenever each step
    # still moves several MiB (per-step overhead ~0.35us stays negligible); also
    # even out the ragged last block when multiple steps exist.
    min_rows_per_step = max(align, (4 << 20) // (x_row_bytes + o_row_bytes))
    if n_i == 1 and out_rows >= 2 * min_rows_per_step:
        n_i = 2
    if n_i > 1:
        tm = min(tm, _round_up(int(pl.cdiv(out_rows, n_i)), align))
        n_i = int(pl.cdiv(out_rows, tm))

    tm_phys = _round_up(tm, sublane)
    needed = 2 * tm_phys * (x_row_bytes + o_row_bytes) + w_bytes
    vmem_limit = int(min(max(needed + (2 << 20), 32 << 20), int(0.9 * vmem_cap)))

    cost = pl.CostEstimate(
        flops=2 * M * C * D,
        transcendentals=0,
        bytes_accessed=itemsize * (M * C + C * D + M * D),
    )

    out2d = pl.pallas_call(
        _embedder_kernel,
        out_shape=jax.ShapeDtypeStruct((out_rows, out_cols), dtype),
        grid_spec=pltpu.PrefetchScalarGridSpec(
            num_scalar_prefetch=0,
            grid=(n_i, n_j),
            in_specs=[
                # x row tile; constant over j so it stays VMEM-resident while the
                # (rarely used) column axis is walked.
                pl.BlockSpec((tm, x_cols), lambda i, j: (i, 0)),
                # weight tile; constant over i -> VMEM-resident across row tiles.
                pl.BlockSpec((x_cols, tn), lambda i, j: (0, j)),
            ],
            out_specs=pl.BlockSpec((tm, tn), lambda i, j: (i, j)),
        ),
        compiler_params=pltpu.CompilerParams(
            # Rows are independent -> shard across v7x's TensorCores; keep the
            # column axis sequential so x is not re-fetched per core.
            dimension_semantics=("parallel", "arbitrary"),
            vmem_limit_bytes=vmem_limit,
        ),
        cost_estimate=cost,
    )(x_kernel, w_kernel)
    # TODO(synk): if traces show exposed DMA waits at large row tiles, deepen the
    # x pipeline with pipeline_mode=pl.Buffered(3) on the x BlockSpec.

    # Free reshapes (exact inverse of the lane-dense regroup); no slicing needed.
    return out2d.reshape(M, D).reshape(B, S, D)


if __name__ == "__main__":
    # Small shapes consistent with the module's forward.
    B, S, C, D = 2, 8, 4, 32  # batch, seq_len, in_channels, d_model

    key = jax.random.PRNGKey(0)
    k_x, k_w = jax.random.split(key)
    src = jax.random.normal(k_x, (B, S, C), dtype=jnp.float32)
    # Deterministic synthetic weight in PyTorch nn.Linear layout [d_model, in_channels].
    weight = jax.random.normal(k_w, (D, C), dtype=jnp.float32) * 0.1

    params = prepare_embedder_weight(weight, n_rows=B * S)   # init-time, not per-forward
    out = embedder_forward(src, params)
    out = jax.block_until_ready(out)

    # Sanity check against plain-JAX reference (x @ W.T).
    ref = jnp.einsum("bsc,dc->bsd", src, weight, precision=lax.Precision.HIGHEST)
    assert out.shape == (B, S, D)
    assert jnp.allclose(out, ref, atol=2e-3, rtol=2e-3), float(jnp.max(jnp.abs(out - ref)))

    print("KERNEL_OK")
</pallas_src>

<mosaic_0001>
module attributes {stable_mosaic.version = 11 : i64} {
  func.func @_embedder_kernel(%arg0: i32, %arg1: i32, %arg2: memref<1x64xf32, #tpu.memory_space<vmem>>, %arg3: memref<64x512xf32, #tpu.memory_space<vmem>>, %arg4: memref<1x512xf32, #tpu.memory_space<vmem>>) attributes {dimension_semantics = [#tpu.dimension_semantics<parallel>, #tpu.dimension_semantics<arbitrary>], iteration_bounds = array<i64: 1, 1>, scalar_prefetch = 0 : i64, scratch_operands = 0 : i64, tpu.core_type = #tpu.core_type<tc>, window_params = [{transform_indices = @transform_0, window_bounds = array<i64: 1, 64>}, {transform_indices = @transform_1, window_bounds = array<i64: 64, 512>}, {transform_indices = @transform_2, window_bounds = array<i64: 1, 512>}]} {
    %c0 = arith.constant 0 : index
    %c0_0 = arith.constant 0 : index
    %0 = vector.load %arg2[%c0, %c0_0] : memref<1x64xf32, #tpu.memory_space<vmem>>, vector<1x64xf32>
    %c0_1 = arith.constant 0 : index
    %c0_2 = arith.constant 0 : index
    %1 = vector.load %arg3[%c0_1, %c0_2] : memref<64x512xf32, #tpu.memory_space<vmem>>, vector<64x512xf32>
    %cst = arith.constant dense<0.000000e+00> : vector<1x512xf32>
    %2 = tpu.matmul %0, %1, %cst {dimension_numbers = #tpu.dot_dimension_numbers<[1], [0], [0], [1], [0, 0, 1, 1], [], []>, precision = #tpu.contract_precision<fp32>} : vector<1x64xf32>, vector<64x512xf32>, vector<1x512xf32> -> vector<1x512xf32>
    %c0_3 = arith.constant 0 : index
    %c0_4 = arith.constant 0 : index
    %3 = vector.load %arg4[%c0_3, %c0_4] : memref<1x512xf32, #tpu.memory_space<vmem>>, vector<1x512xf32>
    tpu.vector_store %arg4[%c0_3, %c0_4], %2 {strides = array<i32>} : memref<1x512xf32, #tpu.memory_space<vmem>>, vector<1x512xf32>,
    return
  }
  func.func @transform_0(%arg0: i32, %arg1: i32) -> (i32, i32) {
    %c0_i32 = arith.constant 0 : i32
    %c0_i32_0 = arith.constant 0 : i32
    return %arg0, %c0_i32 : i32, i32
  }
  func.func @transform_1(%arg0: i32, %arg1: i32) -> (i32, i32) {
    %c0_i32 = arith.constant 0 : i32
    %c0_i32_0 = arith.constant 0 : i32
    return %c0_i32, %arg1 : i32, i32
  }
  func.func @transform_2(%arg0: i32, %arg1: i32) -> (i32, i32) {
    %c0_i32 = arith.constant 0 : i32
    return %arg0, %arg1 : i32, i32
  }
}

</mosaic_0001>

<llo_original>
// kernel: tpu_custom_call.1
$region0: #{tpu_custom_call.1}
  #allocation0 [shape = 'u32[]', space=smem, size = 0x4, offset = 0x4, fixed_abs, tag = 'smem constant byte address 0x4 - core index']
  #allocation1 [shape = 'u32[144,128]{1,0:T(1,128)}', space=vmem, size = 0x12000, scoped, tag = 'internal scratch']
  %s0 = inlined_call_operand.hbm [shape: f32[1,64], index: 0, kind: input, shape index: {}]
  %s1 = inlined_call_operand.hbm [shape: f32[64,512], index: 1, kind: input, shape index: {}]
  %s2 = inlined_call_operand.hbm [shape: f32[1,512], index: 2, kind: output, shape index: {}]
  %s3 = sld [smem:[#allocation0]]
  $region26: #{tpu_custom_call.1} parent=0
    _
  %s5 = ssub.s32 1, %s3
  %s6 = scalar_select 0, %s5, %s3
  $region1: #{tpu_custom_call.1} parent=0
    #allocation2 [shape = 'u8[512]{0}', space=vmem, size = 0x400, scoped, tag = 'input window, operand 0, single buffered']
    #allocation3 [shape = 's32[1]{0}', space=sflag, size = 0x4, scoped, tag = 'scoped memory for tpu_custom_call.1']
    #allocation4 [shape = 's32[1]{0}', space=sflag, size = 0x4, scoped, tag = 'scoped memory for tpu_custom_call.1']
    #allocation5 [shape = 'u8[131072]{0}', space=vmem, size = 0x20000, scoped, tag = 'input window, operand 1, single buffered']
    #allocation6 [shape = 's32[1]{0}', space=sflag, size = 0x4, scoped, tag = 'scoped memory for tpu_custom_call.1']
    #allocation7 [shape = 'u8[2048]{0}', space=vmem, size = 0x800, scoped, tag = 'output window, operand 0, single buffered']
    %7 = vsyncpa [#allocation3], 0
    %8 = vsyncpa [#allocation6], 0
    %9 = vsyncpa [#allocation4], 0
    // Predicated region
    $region2: #{tpu_custom_call.1} parent=1 // pred_check
      _
    $region3: #{tpu_custom_call.1} parent=1 // pred_check_branch
      %11 = sbr.rel (0) target = $region5
    $region4: #{tpu_custom_call.1} parent=1 // pred_region
      %s13 = ssub.s32 16, 16
      %14 = vsyncadd [#allocation3], %s13
      %s16 = sshll.u32 [#allocation2], 4
      %s17 = int_to_ptr.vmem [resolvable:$true] %s16
      %19 = dma.hbm_to_vmem [thread:$0]  %s0, 16, %s17, [#allocation3]
    $region5: #{tpu_custom_call.1} parent=1 // pred_fallthru
      _
    // Predicated region
    $region6: #{tpu_custom_call.1} parent=1 // pred_check
      _
    $region7: #{tpu_custom_call.1} parent=1 // pred_check_branch
      %21 = sbr.rel (0) target = $region9
    $region8: #{tpu_custom_call.1} parent=1 // pred_region
      %s23 = ssub.s32 4096, 4096
      %24 = vsyncadd [#allocation6], %s23
      %s25 = sshll.u32 [#allocation5], 4
      %s26 = int_to_ptr.vmem [resolvable:$true] %s25
      %31 = dma.hbm_to_vmem [thread:$0]  %s1, 4096, %s26, [#allocation6], 512, 512, 32
    $region9: #{tpu_custom_call.1} parent=1 // pred_fallthru
      _
    // Predicated region
    $region10: #{tpu_custom_call.1} parent=1 // pred_check
      _
    $region11: #{tpu_custom_call.1} parent=1 // pred_check_branch
      %33 = sbr.rel (0) target = $region13
    $region12: #{tpu_custom_call.1} parent=1 // pred_region
      %34 = dma.done [#allocation3], 16
    $region13: #{tpu_custom_call.1} parent=1 // pred_fallthru
      _
    // Predicated region
    $region14: #{tpu_custom_call.1} parent=1 // pred_check
      _
    $region15: #{tpu_custom_call.1} parent=1 // pred_check_branch
      %36 = sbr.rel (0) target = $region17
    $region16: #{tpu_custom_call.1} parent=1 // pred_region
      %37 = dma.done [#allocation6], 4096
    $region17: #{tpu_custom_call.1} parent=1 // pred_fallthru
      _
    %v38 = vld [vmem:[#allocation2] sm:$0x1]
    %v39 = vld [vmem:[#allocation5] sm:$0xff]
    %v40 = vld [vmem:[#allocation5 + $0x8] sm:$0xff]
    %v41 = vld [vmem:[#allocation5 + $0x10] sm:$0xff]
    %v42 = vld [vmem:[#allocation5 + $0x18] sm:$0xff]
    %v43 = vld [vmem:[#allocation5 + $0x20] sm:$0xff]
    %v44 = vld [vmem:[#allocation5 + $0x28] sm:$0xff]
    %v45 = vld [vmem:[#allocation5 + $0x30] sm:$0xff]
    %v46 = vld [vmem:[#allocation5 + $0x38] sm:$0xff]
    %v47 = vld [vmem:[#allocation5 + $0x40] sm:$0xff]
    %v48 = vld [vmem:[#allocation5 + $0x48] sm:$0xff]
    %v49 = vld [vmem:[#allocation5 + $0x50] sm:$0xff]
    %v50 = vld [vmem:[#allocation5 + $0x58] sm:$0xff]
    %v51 = vld [vmem:[#allocation5 + $0x60] sm:$0xff]
    %v52 = vld [vmem:[#allocation5 + $0x68] sm:$0xff]
    %v53 = vld [vmem:[#allocation5 + $0x70] sm:$0xff]
    %v54 = vld [vmem:[#allocation5 + $0x78] sm:$0xff]
    %v55 = vld [vmem:[#allocation5 + $0x80] sm:$0xff]
    %v56 = vld [vmem:[#allocation5 + $0x88] sm:$0xff]
    %v57 = vld [vmem:[#allocation5 + $0x90] sm:$0xff]
    %v58 = vld [vmem:[#allocation5 + $0x98] sm:$0xff]
    %v59 = vld [vmem:[#allocation5 + $0xa0] sm:$0xff]
    %v60 = vld [vmem:[#allocation5 + $0xa8] sm:$0xff]
    %v61 = vld [vmem:[#allocation5 + $0xb0] sm:$0xff]
    %v62 = vld [vmem:[#allocation5 + $0xb8] sm:$0xff]
    %v63 = vld [vmem:[#allocation5 + $0xc0] sm:$0xff]
    %v64 = vld [vmem:[#allocation5 + $0xc8] sm:$0xff]
    %v65 = vld [vmem:[#allocation5 + $0xd0] sm:$0xff]
    %v66 = vld [vmem:[#allocation5 + $0xd8] sm:$0xff]
    %v67 = vld [vmem:[#allocation5 + $0xe0] sm:$0xff]
    %v68 = vld [vmem:[#allocation5 + $0xe8] sm:$0xff]
    %v69 = vld [vmem:[#allocation5 + $0xf0] sm:$0xff]
    %v70 = vld [vmem:[#allocation5 + $0xf8] sm:$0xff]
    %vm71 = vcmask 523264
    %v73 = vsel %vm71, %v38, 0
    %v75 = vand.u32 %v40, 4294901760
    %76 = vmatprep.subr.mxu0 %v75
    %v77 = vand.u32 %v39, 4294901760
    %78 = vmatpush1.msra.mxu0 %v77
    %v79 = vand.u32 %v44, 4294901760
    %80 = vmatprep.subr.mxu0 %v79
    %v81 = vand.u32 %v43, 4294901760
    %82 = vmatpush1.msra.mxu0 %v81
    %v83 = vand.u32 %v48, 4294901760
    %84 = vmatprep.subr.mxu0 %v83
    %v85 = vand.u32 %v47, 4294901760
    %86 = vmatpush1.msra.mxu0 %v85
    %v87 = vand.u32 %v52, 4294901760
    %88 = vmatprep.subr.mxu0 %v87
    %v89 = vand.u32 %v51, 4294901760
    %90 = vmatpush1.msra.mxu0 %v89
    %v91 = vand.u32 %v56, 4294901760
    %92 = vmatprep.subr.mxu0 %v91
    %v93 = vand.u32 %v55, 4294901760
    %94 = vmatpush1.msra.mxu0 %v93
    %v95 = vand.u32 %v60, 4294901760
    %96 = vmatprep.subr.mxu0 %v95
    %v97 = vand.u32 %v59, 4294901760
    %98 = vmatpush1.msra.mxu0 %v97
    %v99 = vand.u32 %v64, 4294901760
    %100 = vmatprep.subr.mxu0 %v99
    %v101 = vand.u32 %v63, 4294901760
    %102 = vmatpush1.msra.mxu0 %v101
    %v103 = vand.u32 %v68, 4294901760
    %104 = vmatprep.subr.mxu0 %v103
    %v105 = vand.u32 %v67, 4294901760
    %106 = vmatpush1.msra.mxu0 %v105
    %107 = vmatprep.subr.mxu0 0.0
    %108 = vmatpush1.msra.mxu0 0.0
    %109 = vmatprep.subr.mxu0 0.0
    %110 = vmatpush1.msra.mxu0 0.0
    %111 = vmatprep.subr.mxu0 0.0
    %112 = vmatpush1.msra.mxu0 0.0
    %113 = vmatprep.subr.mxu0 0.0
    %114 = vmatpush1.msra.mxu0 0.0
    %115 = vmatprep.subr.mxu0 0.0
    %116 = vmatpush1.msra.mxu0 0.0
    %117 = vmatprep.subr.mxu0 0.0
    %118 = vmatpush1.msra.mxu0 0.0
    %119 = vmatprep.subr.mxu0 0.0
    %120 = vmatpush1.msra.mxu0 0.0
    %121 = vmatprep.subr.mxu0 0.0
    %122 = vmatpush1.msra.mxu0 0.0
    %123 = vmatprep.subr.mxu0 0.0
    %124 = vmatpush1.msra.mxu0 0.0
    %125 = vmatprep.subr.mxu0 0.0
    %126 = vmatpush1.msra.mxu0 0.0
    %127 = vmatprep.subr.mxu0 0.0
    %128 = vmatpush1.msra.mxu0 0.0
    %129 = vmatprep.subr.mxu0 0.0
    %130 = vmatpush1.msra.mxu0 0.0
    %131 = vmatprep.subr.mxu0 0.0
    %132 = vmatpush1.msra.mxu0 0.0
    %133 = vmatprep.subr.mxu0 0.0
    %134 = vmatpush1.msra.mxu0 0.0
    %135 = vmatprep.subr.mxu0 0.0
    %136 = vmatpush1.msra.mxu0 0.0
    %137 = vmatprep.subr.mxu0 0.0
    %138 = vmatpush1.msra.mxu0 0.0
    %139 = vmatprep.subr.mxu0 0.0
    %140 = vmatpush1.msra.mxu0 0.0
    %141 = vmatprep.subr.mxu0 0.0
    %142 = vmatpush1.msra.mxu0 0.0
    %143 = vmatprep.subr.mxu0 0.0
    %144 = vmatpush1.msra.mxu0 0.0
    %145 = vmatprep.subr.mxu0 0.0
    %146 = vmatpush1.msra.mxu0 0.0
    %147 = vmatprep.subr.mxu0 0.0
    %148 = vmatpush1.msra.mxu0 0.0
    %149 = vmatprep.subr.mxu0 0.0
    %150 = vmatpush1.msra.mxu0 0.0
    %151 = vmatprep.subr.mxu0 0.0
    %152 = vmatpush1.msra.mxu0 0.0
    %153 = vmatprep.subr.mxu0 0.0
    %154 = vmatpush1.msra.mxu0 0.0
    %155 = vmatprep.mubr.f32.mxu0 0.0
    %v156 = vand.u32 %v73, 4294901760
    %v157 = vsub.f32 %v73, %v156
    %v158 = vand.u32 %v157, 4294901760
    %v159 = vsub.f32 %v157, %v158
    %v160 = vand.u32 %v159, 4294901760
    %161 = vmatmul.mubr.f32.gmra.mrb[0].mxu0 %v160
    %v162 = vpop.f32.mrb[0].mxu0
    %v163 = vadd.f32 0.0, %v162
    %v164 = vpop.f32.mrb[0].mxu0
    %v165 = vadd.f32 0.0, %v164
    %166 = vdwg.mxu0
    %v167 = vand.u32 %v40, 4294901760
    %v168 = vsub.f32 %v40, %v167
    %v169 = vand.u32 %v168, 4294901760
    %v170 = vsub.f32 %v168, %v169
    %v171 = vand.u32 %v170, 4294901760
    %172 = vmatprep.subr.mxu0 %v171
    %v173 = vand.u32 %v39, 4294901760
    %v174 = vsub.f32 %v39, %v173
    %v175 = vand.u32 %v174, 4294901760
    %v176 = vsub.f32 %v174, %v175
    %v177 = vand.u32 %v176, 4294901760
    %178 = vmatpush1.msra.mxu0 %v177
    %v179 = vand.u32 %v44, 4294901760
    %v180 = vsub.f32 %v44, %v179
    %v181 = vand.u32 %v180, 4294901760
    %v182 = vsub.f32 %v180, %v181
    %v183 = vand.u32 %v182, 4294901760
    %184 = vmatprep.subr.mxu0 %v183
    %v185 = vand.u32 %v43, 4294901760
    %v186 = vsub.f32 %v43, %v185
    %v187 = vand.u32 %v186, 4294901760
    %v188 = vsub.f32 %v186, %v187
    %v189 = vand.u32 %v188, 4294901760
    %190 = vmatpush1.msra.mxu0 %v189
    %v191 = vand.u32 %v48, 4294901760
    %v192 = vsub.f32 %v48, %v191
    %v193 = vand.u32 %v192, 4294901760
    %v194 = vsub.f32 %v192, %v193
    %v195 = vand.u32 %v194, 4294901760
    %196 = vmatprep.subr.mxu0 %v195
    %v197 = vand.u32 %v47, 4294901760
    %v198 = vsub.f32 %v47, %v197
    %v199 = vand.u32 %v198, 4294901760
    %v200 = vsub.f32 %v198, %v199
    %v201 = vand.u32 %v200, 4294901760
    %202 = vmatpush1.msra.mxu0 %v201
    %v203 = vand.u32 %v52, 4294901760
    %v204 = vsub.f32 %v52, %v203
    %v205 = vand.u32 %v204, 4294901760
    %v206 = vsub.f32 %v204, %v205
    %v207 = vand.u32 %v206, 4294901760
    %208 = vmatprep.subr.mxu0 %v207
    %v209 = vand.u32 %v51, 4294901760
    %v210 = vsub.f32 %v51, %v209
    %v211 = vand.u32 %v210, 4294901760
    %v212 = vsub.f32 %v210, %v211
    %v213 = vand.u32 %v212, 4294901760
    %214 = vmatpush1.msra.mxu0 %v213
    %v215 = vand.u32 %v56, 4294901760
    %v216 = vsub.f32 %v56, %v215
    %v217 = vand.u32 %v216, 4294901760
    %v218 = vsub.f32 %v216, %v217
    %v219 = vand.u32 %v218, 4294901760
    %220 = vmatprep.subr.mxu0 %v219
    %v221 = vand.u32 %v55, 4294901760
    %v222 = vsub.f32 %v55, %v221
    %v223 = vand.u32 %v222, 4294901760
    %v224 = vsub.f32 %v222, %v223
    %v225 = vand.u32 %v224, 4294901760
    %226 = vmatpush1.msra.mxu0 %v225
    %v227 = vand.u32 %v60, 4294901760
    %v228 = vsub.f32 %v60, %v227
    %v229 = vand.u32 %v228, 4294901760
    %v230 = vsub.f32 %v228, %v229
    %v231 = vand.u32 %v230, 4294901760
    %232 = vmatprep.subr.mxu0 %v231
    %v233 = vand.u32 %v59, 4294901760
    %v234 = vsub.f32 %v59, %v233
    %v235 = vand.u32 %v234, 4294901760
    %v236 = vsub.f32 %v234, %v235
    %v237 = vand.u32 %v236, 4294901760
    %238 = vmatpush1.msra.mxu0 %v237
    %v239 = vand.u32 %v64, 4294901760
    %v240 = vsub.f32 %v64, %v239
    %v241 = vand.u32 %v240, 4294901760
    %v242 = vsub.f32 %v240, %v241
    %v243 = vand.u32 %v242, 4294901760
    %244 = vmatprep.subr.mxu0 %v243
    %v245 = vand.u32 %v63, 4294901760
    %v246 = vsub.f32 %v63, %v245
    %v247 = vand.u32 %v246, 4294901760
    %v248 = vsub.f32 %v246, %v247
    %v249 = vand.u32 %v248, 4294901760
    %250 = vmatpush1.msra.mxu0 %v249
    %v251 = vand.u32 %v68, 4294901760
    %v252 = vsub.f32 %v68, %v251
    %v253 = vand.u32 %v252, 4294901760
    %v254 = vsub.f32 %v252, %v253
    %v255 = vand.u32 %v254, 4294901760
    %256 = vmatprep.subr.mxu0 %v255
    %v257 = vand.u32 %v67, 4294901760
    %v258 = vsub.f32 %v67, %v257
    %v259 = vand.u32 %v258, 4294901760
    %v260 = vsub.f32 %v258, %v259
    %v261 = vand.u32 %v260, 4294901760
    %262 = vmatpush1.msra.mxu0 %v261
    %263 = vmatprep.subr.mxu0 0.0
    %264 = vmatpush1.msra.mxu0 0.0
    %265 = vmatprep.subr.mxu0 0.0
    %266 = vmatpush1.msra.mxu0 0.0
    %267 = vmatprep.subr.mxu0 0.0
    %268 = vmatpush1.msra.mxu0 0.0
    %269 = vmatprep.subr.mxu0 0.0
    %270 = vmatpush1.msra.mxu0 0.0
    %271 = vmatprep.subr.mxu0 0.0
    %272 = vmatpush1.msra.mxu0 0.0
    %273 = vmatprep.subr.mxu0 0.0
    %274 = vmatpush1.msra.mxu0 0.0
    %275 = vmatprep.subr.mxu0 0.0
    %276 = vmatpush1.msra.mxu0 0.0
    %277 = vmatprep.subr.mxu0 0.0
    %278 = vmatpush1.msra.mxu0 0.0
    %279 = vmatprep.subr.mxu0 0.0
    %280 = vmatpush1.msra.mxu0 0.0
    %281 = vmatprep.subr.mxu0 0.0
    %282 = vmatpush1.msra.mxu0 0.0
    %283 = vmatprep.subr.mxu0 0.0
    %284 = vmatpush1.msra.mxu0 0.0
    %285 = vmatprep.subr.mxu0 0.0
    %286 = vmatpush1.msra.mxu0 0.0
    %287 = vmatprep.subr.mxu0 0.0
    %288 = vmatpush1.msra.mxu0 0.0
    %289 = vmatprep.subr.mxu0 0.0
    %290 = vmatpush1.msra.mxu0 0.0
    %291 = vmatprep.subr.mxu0 0.0
    %292 = vmatpush1.msra.mxu0 0.0
    %293 = vmatprep.subr.mxu0 0.0
    %294 = vmatpush1.msra.mxu0 0.0
    %295 = vmatprep.subr.mxu0 0.0
    %296 = vmatpush1.msra.mxu0 0.0
    %297 = vmatprep.subr.mxu0 0.0
    %298 = vmatpush1.msra.mxu0 0.0
    %299 = vmatprep.subr.mxu0 0.0
    %300 = vmatpush1.msra.mxu0 0.0
    %301 = vmatprep.subr.mxu0 0.0
    %302 = vmatpush1.msra.mxu0 0.0
    %303 = vmatprep.subr.mxu0 0.0
    %304 = vmatpush1.msra.mxu0 0.0
    %305 = vmatprep.subr.mxu0 0.0
    %306 = vmatpush1.msra.mxu0 0.0
    %307 = vmatprep.subr.mxu0 0.0
    %308 = vmatpush1.msra.mxu0 0.0
    %309 = vmatprep.subr.mxu0 0.0
    %310 = vmatpush1.msra.mxu0 0.0
    %311 = vmatprep.mubr.f32.mxu0 0.0
    %v312 = vand.u32 %v73, 4294901760
    %313 = vmatmul.mubr.f32.gmra.mrb[0].mxu0 %v312
    %v314 = vpop.f32.mrb[0].mxu0
    %v315 = vadd.f32 %v163, %v314
    %v316 = vpop.f32.mrb[0].mxu0
    %v317 = vadd.f32 %v165, %v316
    %318 = vdwg.mxu0
    %v319 = vand.u32 %v40, 4294901760
    %v320 = vsub.f32 %v40, %v319
    %321 = vmatprep.subr.mxu0 %v320
    %v322 = vand.u32 %v39, 4294901760
    %v323 = vsub.f32 %v39, %v322
    %324 = vmatpush1.msra.mxu0 %v323
    %v325 = vand.u32 %v44, 4294901760
    %v326 = vsub.f32 %v44, %v325
    %327 = vmatprep.subr.mxu0 %v326
    %v328 = vand.u32 %v43, 4294901760
    %v329 = vsub.f32 %v43, %v328
    %330 = vmatpush1.msra.mxu0 %v329
    %v331 = vand.u32 %v48, 4294901760
    %v332 = vsub.f32 %v48, %v331
    %333 = vmatprep.subr.mxu0 %v332
    %v334 = vand.u32 %v47, 4294901760
    %v335 = vsub.f32 %v47, %v334
    %336 = vmatpush1.msra.mxu0 %v335
    %v337 = vand.u32 %v52, 4294901760
    %v338 = vsub.f32 %v52, %v337
    %339 = vmatprep.subr.mxu0 %v338
    %v340 = vand.u32 %v51, 4294901760
    %v341 = vsub.f32 %v51, %v340
    %342 = vmatpush1.msra.mxu0 %v341
    %v343 = vand.u32 %v56, 4294901760
    %v344 = vsub.f32 %v56, %v343
    %345 = vmatprep.subr.mxu0 %v344
    %v346 = vand.u32 %v55, 4294901760
    %v347 = vsub.f32 %v55, %v346
    %348 = vmatpush1.msra.mxu0 %v347
    %v349 = vand.u32 %v60, 4294901760
    %v350 = vsub.f32 %v60, %v349
    %351 = vmatprep.subr.mxu0 %v350
    %v352 = vand.u32 %v59, 4294901760
    %v353 = vsub.f32 %v59, %v352
    %354 = vmatpush1.msra.mxu0 %v353
    %v355 = vand.u32 %v64, 4294901760
    %v356 = vsub.f32 %v64, %v355
    %357 = vmatprep.subr.mxu0 %v356
    %v358 = vand.u32 %v63, 4294901760
    %v359 = vsub.f32 %v63, %v358
    %360 = vmatpush1.msra.mxu0 %v359
    %v361 = vand.u32 %v68, 4294901760
    %v362 = vsub.f32 %v68, %v361
    %363 = vmatprep.subr.mxu0 %v362
    %v364 = vand.u32 %v67, 4294901760
    %v365 = vsub.f32 %v67, %v364
    %366 = vmatpush1.msra.mxu0 %v365
    %367 = vmatprep.subr.mxu0 0.0
    %368 = vmatpush1.msra.mxu0 0.0
    %369 = vmatprep.subr.mxu0 0.0
    %370 = vmatpush1.msra.mxu0 0.0
    %371 = vmatprep.subr.mxu0 0.0
    %372 = vmatpush1.msra.mxu0 0.0
    %373 = vmatprep.subr.mxu0 0.0
    %374 = vmatpush1.msra.mxu0 0.0
    %375 = vmatprep.subr.mxu0 0.0
    %376 = vmatpush1.msra.mxu0 0.0
    %377 = vmatprep.subr.mxu0 0.0
    %378 = vmatpush1.msra.mxu0 0.0
    %379 = vmatprep.subr.mxu0 0.0
    %380 = vmatpush1.msra.mxu0 0.0
    %381 = vmatprep.subr.mxu0 0.0
    %382 = vmatpush1.msra.mxu0 0.0
    %383 = vmatprep.subr.mxu0 0.0
    %384 = vmatpush1.msra.mxu0 0.0
    %385 = vmatprep.subr.mxu0 0.0
    %386 = vmatpush1.msra.mxu0 0.0
    %387 = vmatprep.subr.mxu0 0.0
    %388 = vmatpush1.msra.mxu0 0.0
    %389 = vmatprep.subr.mxu0 0.0
    %390 = vmatpush1.msra.mxu0 0.0
    %391 = vmatprep.subr.mxu0 0.0
    %392 = vmatpush1.msra.mxu0 0.0
    %393 = vmatprep.subr.mxu0 0.0
    %394 = vmatpush1.msra.mxu0 0.0
    %395 = vmatprep.subr.mxu0 0.0
    %396 = vmatpush1.msra.mxu0 0.0
    %397 = vmatprep.subr.mxu0 0.0
    %398 = vmatpush1.msra.mxu0 0.0
    %399 = vmatprep.subr.mxu0 0.0
    %400 = vmatpush1.msra.mxu0 0.0
    %401 = vmatprep.subr.mxu0 0.0
    %402 = vmatpush1.msra.mxu0 0.0
    %403 = vmatprep.subr.mxu0 0.0
    %404 = vmatpush1.msra.mxu0 0.0
    %405 = vmatprep.subr.mxu0 0.0
    %406 = vmatpush1.msra.mxu0 0.0
    %407 = vmatprep.subr.mxu0 0.0
    %408 = vmatpush1.msra.mxu0 0.0
    %409 = vmatprep.subr.mxu0 0.0
    %410 = vmatpush1.msra.mxu0 0.0
    %411 = vmatprep.subr.mxu0 0.0
    %412 = vmatpush1.msra.mxu0 0.0
    %413 = vmatprep.subr.mxu0 0.0
    %414 = vmatpush1.msra.mxu0 0.0
    %415 = vmatprep.mubr.f32.mxu0 0.0
    %v416 = vand.u32 %v73, 4294901760
    %v417 = vsub.f32 %v73, %v416
    %418 = vmatmul.mubr.f32.gmra.mrb[0].mxu0 %v417
    %v419 = vpop.f32.mrb[0].mxu0
    %v420 = vadd.f32 %v315, %v419
    %v421 = vpop.f32.mrb[0].mxu0
    %v422 = vadd.f32 %v317, %v421
    %423 = vdwg.mxu0
    %v424 = vand.u32 %v40, 4294901760
    %425 = vmatprep.subr.mxu0 %v424
    %v426 = vand.u32 %v39, 4294901760
    %427 = vmatpush1.msra.mxu0 %v426
    %v428 = vand.u32 %v44, 4294901760
    %429 = vmatprep.subr.mxu0 %v428
    %v430 = vand.u32 %v43, 4294901760
    %431 = vmatpush1.msra.mxu0 %v430
    %v432 = vand.u32 %v48, 4294901760
    %433 = vmatprep.subr.mxu0 %v432
    %v434 = vand.u32 %v47, 4294901760
    %435 = vmatpush1.msra.mxu0 %v434
    %v436 = vand.u32 %v52, 4294901760
    %437 = vmatprep.subr.mxu0 %v436
    %v438 = vand.u32 %v51, 4294901760
    %439 = vmatpush1.msra.mxu0 %v438
    %v440 = vand.u32 %v56, 4294901760
    %441 = vmatprep.subr.mxu0 %v440
    %v442 = vand.u32 %v55, 4294901760
    %443 = vmatpush1.msra.mxu0 %v442
    %v444 = vand.u32 %v60, 4294901760
    %445 = vmatprep.subr.mxu0 %v444
    %v446 = vand.u32 %v59, 4294901760
    %447 = vmatpush1.msra.mxu0 %v446
    %v448 = vand.u32 %v64, 4294901760
    %449 = vmatprep.subr.mxu0 %v448
    %v450 = vand.u32 %v63, 4294901760
    %451 = vmatpush1.msra.mxu0 %v450
    %v452 = vand.u32 %v68, 4294901760
    %453 = vmatprep.subr.mxu0 %v452
    %v454 = vand.u32 %v67, 4294901760
    %455 = vmatpush1.msra.mxu0 %v454
    %456 = vmatprep.subr.mxu0 0.0
    %457 = vmatpush1.msra.mxu0 0.0
    %458 = vmatprep.subr.mxu0 0.0
    %459 = vmatpush1.msra.mxu0 0.0
    %460 = vmatprep.subr.mxu0 0.0
    %461 = vmatpush1.msra.mxu0 0.0
    %462 = vmatprep.subr.mxu0 0.0
    %463 = vmatpush1.msra.mxu0 0.0
    %464 = vmatprep.subr.mxu0 0.0
    %465 = vmatpush1.msra.mxu0 0.0
    %466 = vmatprep.subr.mxu0 0.0
    %467 = vmatpush1.msra.mxu0 0.0
    %468 = vmatprep.subr.mxu0 0.0
    %469 = vmatpush1.msra.mxu0 0.0
    %470 = vmatprep.subr.mxu0 0.0
    %471 = vmatpush1.msra.mxu0 0.0
    %472 = vmatprep.subr.mxu0 0.0
    %473 = vmatpush1.msra.mxu0 0.0
    %474 = vmatprep.subr.mxu0 0.0
    %475 = vmatpush1.msra.mxu0 0.0
    %476 = vmatprep.subr.mxu0 0.0
    %477 = vmatpush1.msra.mxu0 0.0
    %478 = vmatprep.subr.mxu0 0.0
    %479 = vmatpush1.msra.mxu0 0.0
    %480 = vmatprep.subr.mxu0 0.0
    %481 = vmatpush1.msra.mxu0 0.0
    %482 = vmatprep.subr.mxu0 0.0
    %483 = vmatpush1.msra.mxu0 0.0
    %484 = vmatprep.subr.mxu0 0.0
    %485 = vmatpush1.msra.mxu0 0.0
    %486 = vmatprep.subr.mxu0 0.0
    %487 = vmatpush1.msra.mxu0 0.0
    %488 = vmatprep.subr.mxu0 0.0
    %489 = vmatpush1.msra.mxu0 0.0
    %490 = vmatprep.subr.mxu0 0.0
    %491 = vmatpush1.msra.mxu0 0.0
    %492 = vmatprep.subr.mxu0 0.0
    %493 = vmatpush1.msra.mxu0 0.0
    %494 = vmatprep.subr.mxu0 0.0
    %495 = vmatpush1.msra.mxu0 0.0
    %496 = vmatprep.subr.mxu0 0.0
    %497 = vmatpush1.msra.mxu0 0.0
    %498 = vmatprep.subr.mxu0 0.0
    %499 = vmatpush1.msra.mxu0 0.0
    %500 = vmatprep.subr.mxu0 0.0
    %501 = vmatpush1.msra.mxu0 0.0
    %502 = vmatprep.subr.mxu0 0.0
    %503 = vmatpush1.msra.mxu0 0.0
    %504 = vmatprep.mubr.f32.mxu0 0.0
    %v505 = vand.u32 %v73, 4294901760
    %v506 = vsub.f32 %v73, %v505
    %v507 = vand.u32 %v506, 4294901760
    %508 = vmatmul.mubr.f32.gmra.mrb[0].mxu0 %v507
    %v509 = vpop.f32.mrb[0].mxu0
    %v510 = vadd.f32 %v420, %v509
    %v511 = vpop.f32.mrb[0].mxu0
    %v512 = vadd.f32 %v422, %v511
    %513 = vdwg.mxu0
    %v514 = vand.u32 %v40, 4294901760
    %v515 = vsub.f32 %v40, %v514
    %v516 = vand.u32 %v515, 4294901760
    %517 = vmatprep.subr.mxu0 %v516
    %v518 = vand.u32 %v39, 4294901760
    %v519 = vsub.f32 %v39, %v518
    %v520 = vand.u32 %v519, 4294901760
    %521 = vmatpush1.msra.mxu0 %v520
    %v522 = vand.u32 %v44, 4294901760
    %v523 = vsub.f32 %v44, %v522
    %v524 = vand.u32 %v523, 4294901760
    %525 = vmatprep.subr.mxu0 %v524
    %v526 = vand.u32 %v43, 4294901760
    %v527 = vsub.f32 %v43, %v526
    %v528 = vand.u32 %v527, 4294901760
    %529 = vmatpush1.msra.mxu0 %v528
    %v530 = vand.u32 %v48, 4294901760
    %v531 = vsub.f32 %v48, %v530
    %v532 = vand.u32 %v531, 4294901760
    %533 = vmatprep.subr.mxu0 %v532
    %v534 = vand.u32 %v47, 4294901760
    %v535 = vsub.f32 %v47, %v534
    %v536 = vand.u32 %v535, 4294901760
    %537 = vmatpush1.msra.mxu0 %v536
    %v538 = vand.u32 %v52, 4294901760
    %v539 = vsub.f32 %v52, %v538
    %v540 = vand.u32 %v539, 4294901760
    %541 = vmatprep.subr.mxu0 %v540
    %v542 = vand.u32 %v51, 4294901760
    %v543 = vsub.f32 %v51, %v542
    %v544 = vand.u32 %v543, 4294901760
    %545 = vmatpush1.msra.mxu0 %v544
    %v546 = vand.u32 %v56, 4294901760
    %v547 = vsub.f32 %v56, %v546
    %v548 = vand.u32 %v547, 4294901760
    %549 = vmatprep.subr.mxu0 %v548
    %v550 = vand.u32 %v55, 4294901760
    %v551 = vsub.f32 %v55, %v550
    %v552 = vand.u32 %v551, 4294901760
    %553 = vmatpush1.msra.mxu0 %v552
    %v554 = vand.u32 %v60, 4294901760
    %v555 = vsub.f32 %v60, %v554
    %v556 = vand.u32 %v555, 4294901760
    %557 = vmatprep.subr.mxu0 %v556
    %v558 = vand.u32 %v59, 4294901760
    %v559 = vsub.f32 %v59, %v558
    %v560 = vand.u32 %v559, 4294901760
    %561 = vmatpush1.msra.mxu0 %v560
    %v562 = vand.u32 %v64, 4294901760
    %v563 = vsub.f32 %v64, %v562
    %v564 = vand.u32 %v563, 4294901760
    %565 = vmatprep.subr.mxu0 %v564
    %v566 = vand.u32 %v63, 4294901760
    %v567 = vsub.f32 %v63, %v566
    %v568 = vand.u32 %v567, 4294901760
    %569 = vmatpush1.msra.mxu0 %v568
    %v570 = vand.u32 %v68, 4294901760
    %v571 = vsub.f32 %v68, %v570
    %v572 = vand.u32 %v571, 4294901760
    %573 = vmatprep.subr.mxu0 %v572
    %v574 = vand.u32 %v67, 4294901760
    %v575 = vsub.f32 %v67, %v574
    %v576 = vand.u32 %v575, 4294901760
    %577 = vmatpush1.msra.mxu0 %v576
    %578 = vmatprep.subr.mxu0 0.0
    %579 = vmatpush1.msra.mxu0 0.0
    %580 = vmatprep.subr.mxu0 0.0
    %581 = vmatpush1.msra.mxu0 0.0
    %582 = vmatprep.subr.mxu0 0.0
    %583 = vmatpush1.msra.mxu0 0.0
    %584 = vmatprep.subr.mxu0 0.0
    %585 = vmatpush1.msra.mxu0 0.0
    %586 = vmatprep.subr.mxu0 0.0
    %587 = vmatpush1.msra.mxu0 0.0
    %588 = vmatprep.subr.mxu0 0.0
    %589 = vmatpush1.msra.mxu0 0.0
    %590 = vmatprep.subr.mxu0 0.0
    %591 = vmatpush1.msra.mxu0 0.0
    %592 = vmatprep.subr.mxu0 0.0
    %593 = vmatpush1.msra.mxu0 0.0
    %594 = vmatprep.subr.mxu0 0.0
    %595 = vmatpush1.msra.mxu0 0.0
    %596 = vmatprep.subr.mxu0 0.0
    %597 = vmatpush1.msra.mxu0 0.0
    %598 = vmatprep.subr.mxu0 0.0
    %599 = vmatpush1.msra.mxu0 0.0
    %600 = vmatprep.subr.mxu0 0.0
    %601 = vmatpush1.msra.mxu0 0.0
    %602 = vmatprep.subr.mxu0 0.0
    %603 = vmatpush1.msra.mxu0 0.0
    %604 = vmatprep.subr.mxu0 0.0
    %605 = vmatpush1.msra.mxu0 0.0
    %606 = vmatprep.subr.mxu0 0.0
    %607 = vmatpush1.msra.mxu0 0.0
    %608 = vmatprep.subr.mxu0 0.0
    %609 = vmatpush1.msra.mxu0 0.0
    %610 = vmatprep.subr.mxu0 0.0
    %611 = vmatpush1.msra.mxu0 0.0
    %612 = vmatprep.subr.mxu0 0.0
    %613 = vmatpush1.msra.mxu0 0.0
    %614 = vmatprep.subr.mxu0 0.0
    %615 = vmatpush1.msra.mxu0 0.0
    %616 = vmatprep.subr.mxu0 0.0
    %617 = vmatpush1.msra.mxu0 0.0
    %618 = vmatprep.subr.mxu0 0.0
    %619 = vmatpush1.msra.mxu0 0.0
    %620 = vmatprep.subr.mxu0 0.0
    %621 = vmatpush1.msra.mxu0 0.0
    %622 = vmatprep.subr.mxu0 0.0
    %623 = vmatpush1.msra.mxu0 0.0
    %624 = vmatprep.subr.mxu0 0.0
    %625 = vmatpush1.msra.mxu0 0.0
    %626 = vmatprep.mubr.f32.mxu0 0.0
    %v627 = vand.u32 %v73, 4294901760
    %628 = vmatmul.mubr.f32.gmra.mrb[0].mxu0 %v627
    %v629 = vpop.f32.mrb[0].mxu0
    %v630 = vadd.f32 %v510, %v629
    %v631 = vpop.f32.mrb[0].mxu0
    %v632 = vadd.f32 %v512, %v631
    %633 = vdwg.mxu0
    %v634 = vand.u32 %v40, 4294901760
    %635 = vmatprep.subr.mxu0 %v634
    %v636 = vand.u32 %v39, 4294901760
    %637 = vmatpush1.msra.mxu0 %v636
    %v638 = vand.u32 %v44, 4294901760
    %639 = vmatprep.subr.mxu0 %v638
    %v640 = vand.u32 %v43, 4294901760
    %641 = vmatpush1.msra.mxu0 %v640
    %v642 = vand.u32 %v48, 4294901760
    %643 = vmatprep.subr.mxu0 %v642
    %v644 = vand.u32 %v47, 4294901760
    %645 = vmatpush1.msra.mxu0 %v644
    %v646 = vand.u32 %v52, 4294901760
    %647 = vmatprep.subr.mxu0 %v646
    %v648 = vand.u32 %v51, 4294901760
    %649 = vmatpush1.msra.mxu0 %v648
    %v650 = vand.u32 %v56, 4294901760
    %651 = vmatprep.subr.mxu0 %v650
    %v652 = vand.u32 %v55, 4294901760
    %653 = vmatpush1.msra.mxu0 %v652
    %v654 = vand.u32 %v60, 4294901760
    %655 = vmatprep.subr.mxu0 %v654
    %v656 = vand.u32 %v59, 4294901760
    %657 = vmatpush1.msra.mxu0 %v656
    %v658 = vand.u32 %v64, 4294901760
    %659 = vmatprep.subr.mxu0 %v658
    %v660 = vand.u32 %v63, 4294901760
    %661 = vmatpush1.msra.mxu0 %v660
    %v662 = vand.u32 %v68, 4294901760
    %663 = vmatprep.subr.mxu0 %v662
    %v664 = vand.u32 %v67, 4294901760
    %665 = vmatpush1.msra.mxu0 %v664
    %666 = vmatprep.subr.mxu0 0.0
    %667 = vmatpush1.msra.mxu0 0.0
    %668 = vmatprep.subr.mxu0 0.0
    %669 = vmatpush1.msra.mxu0 0.0
    %670 = vmatprep.subr.mxu0 0.0
    %671 = vmatpush1.msra.mxu0 0.0
    %672 = vmatprep.subr.mxu0 0.0
    %673 = vmatpush1.msra.mxu0 0.0
    %674 = vmatprep.subr.mxu0 0.0
    %675 = vmatpush1.msra.mxu0 0.0
    %676 = vmatprep.subr.mxu0 0.0
    %677 = vmatpush1.msra.mxu0 0.0
    %678 = vmatprep.subr.mxu0 0.0
    %679 = vmatpush1.msra.mxu0 0.0
    %680 = vmatprep.subr.mxu0 0.0
    %681 = vmatpush1.msra.mxu0 0.0
    %682 = vmatprep.subr.mxu0 0.0
    %683 = vmatpush1.msra.mxu0 0.0
    %684 = vmatprep.subr.mxu0 0.0
    %685 = vmatpush1.msra.mxu0 0.0
    %686 = vmatprep.subr.mxu0 0.0
    %687 = vmatpush1.msra.mxu0 0.0
    %688 = vmatprep.subr.mxu0 0.0
    %689 = vmatpush1.msra.mxu0 0.0
    %690 = vmatprep.subr.mxu0 0.0
    %691 = vmatpush1.msra.mxu0 0.0
    %692 = vmatprep.subr.mxu0 0.0
    %693 = vmatpush1.msra.mxu0 0.0
    %694 = vmatprep.subr.mxu0 0.0
    %695 = vmatpush1.msra.mxu0 0.0
    %696 = vmatprep.subr.mxu0 0.0
    %697 = vmatpush1.msra.mxu0 0.0
    %698 = vmatprep.subr.mxu0 0.0
    %699 = vmatpush1.msra.mxu0 0.0
    %700 = vmatprep.subr.mxu0 0.0
    %701 = vmatpush1.msra.mxu0 0.0
    %702 = vmatprep.subr.mxu0 0.0
    %703 = vmatpush1.msra.mxu0 0.0
    %704 = vmatprep.subr.mxu0 0.0
    %705 = vmatpush1.msra.mxu0 0.0
    %706 = vmatprep.subr.mxu0 0.0
    %707 = vmatpush1.msra.mxu0 0.0
    %708 = vmatprep.subr.mxu0 0.0
    %709 = vmatpush1.msra.mxu0 0.0
    %710 = vmatprep.subr.mxu0 0.0
    %711 = vmatpush1.msra.mxu0 0.0
    %712 = vmatprep.subr.mxu0 0.0
    %713 = vmatpush1.msra.mxu0 0.0
    %714 = vmatprep.mubr.f32.mxu0 0.0
    %v715 = vand.u32 %v73, 4294901760
    %716 = vmatmul.mubr.f32.gmra.mrb[0].mxu0 %v715
    %v717 = vpop.f32.mrb[0].mxu0
    %v718 = vadd.f32 %v630, %v717
    %v719 = vpop.f32.mrb[0].mxu0
    %v720 = vadd.f32 %v632, %v719
    %721 = vdwg.mxu0
    %v722 = vand.u32 %v42, 4294901760
    %723 = vmatprep.subr.mxu0 %v722
    %v724 = vand.u32 %v41, 4294901760
    %725 = vmatpush1.msra.mxu0 %v724
    %v726 = vand.u32 %v46, 4294901760
    %727 = vmatprep.subr.mxu0 %v726
    %v728 = vand.u32 %v45, 4294901760
    %729 = vmatpush1.msra.mxu0 %v728
    %v730 = vand.u32 %v50, 4294901760
    %731 = vmatprep.subr.mxu0 %v730
    %v732 = vand.u32 %v49, 4294901760
    %733 = vmatpush1.msra.mxu0 %v732
    %v734 = vand.u32 %v54, 4294901760
    %735 = vmatprep.subr.mxu0 %v734
    %v736 = vand.u32 %v53, 4294901760
    %737 = vmatpush1.msra.mxu0 %v736
    %v738 = vand.u32 %v58, 4294901760
    %739 = vmatprep.subr.mxu0 %v738
    %v740 = vand.u32 %v57, 4294901760
    %741 = vmatpush1.msra.mxu0 %v740
    %v742 = vand.u32 %v62, 4294901760
    %743 = vmatprep.subr.mxu0 %v742
    %v744 = vand.u32 %v61, 4294901760
    %745 = vmatpush1.msra.mxu0 %v744
    %v746 = vand.u32 %v66, 4294901760
    %747 = vmatprep.subr.mxu0 %v746
    %v748 = vand.u32 %v65, 4294901760
    %749 = vmatpush1.msra.mxu0 %v748
    %v750 = vand.u32 %v70, 4294901760
    %751 = vmatprep.subr.mxu0 %v750
    %v752 = vand.u32 %v69, 4294901760
    %753 = vmatpush1.msra.mxu0 %v752
    %754 = vmatprep.subr.mxu0 0.0
    %755 = vmatpush1.msra.mxu0 0.0
    %756 = vmatprep.subr.mxu0 0.0
    %757 = vmatpush1.msra.mxu0 0.0
    %758 = vmatprep.subr.mxu0 0.0
    %759 = vmatpush1.msra.mxu0 0.0
    %760 = vmatprep.subr.mxu0 0.0
    %761 = vmatpush1.msra.mxu0 0.0
    %762 = vmatprep.subr.mxu0 0.0
    %763 = vmatpush1.msra.mxu0 0.0
    %764 = vmatprep.subr.mxu0 0.0
    %765 = vmatpush1.msra.mxu0 0.0
    %766 = vmatprep.subr.mxu0 0.0
    %767 = vmatpush1.msra.mxu0 0.0
    %768 = vmatprep.subr.mxu0 0.0
    %769 = vmatpush1.msra.mxu0 0.0
    %770 = vmatprep.subr.mxu0 0.0
    %771 = vmatpush1.msra.mxu0 0.0
    %772 = vmatprep.subr.mxu0 0.0
    %773 = vmatpush1.msra.mxu0 0.0
    %774 = vmatprep.subr.mxu0 0.0
    %775 = vmatpush1.msra.mxu0 0.0
    %776 = vmatprep.subr.mxu0 0.0
    %777 = vmatpush1.msra.mxu0 0.0
    %778 = vmatprep.subr.mxu0 0.0
    %779 = vmatpush1.msra.mxu0 0.0
    %780 = vmatprep.subr.mxu0 0.0
    %781 = vmatpush1.msra.mxu0 0.0
    %782 = vmatprep.subr.mxu0 0.0
    %783 = vmatpush1.msra.mxu0 0.0
    %784 = vmatprep.subr.mxu0 0.0
    %785 = vmatpush1.msra.mxu0 0.0
    %786 = vmatprep.subr.mxu0 0.0
    %787 = vmatpush1.msra.mxu0 0.0
    %788 = vmatprep.subr.mxu0 0.0
    %789 = vmatpush1.msra.mxu0 0.0
    %790 = vmatprep.subr.mxu0 0.0
    %791 = vmatpush1.msra.mxu0 0.0
    %792 = vmatprep.subr.mxu0 0.0
    %793 = vmatpush1.msra.mxu0 0.0
    %794 = vmatprep.subr.mxu0 0.0
    %795 = vmatpush1.msra.mxu0 0.0
    %796 = vmatprep.subr.mxu0 0.0
    %797 = vmatpush1.msra.mxu0 0.0
    %798 = vmatprep.subr.mxu0 0.0
    %799 = vmatpush1.msra.mxu0 0.0
    %800 = vmatprep.subr.mxu0 0.0
    %801 = vmatpush1.msra.mxu0 0.0
    %802 = vmatprep.mubr.f32.mxu0 0.0
    %v803 = vand.u32 %v73, 4294901760
    %v804 = vsub.f32 %v73, %v803
    %v805 = vand.u32 %v804, 4294901760
    %v806 = vsub.f32 %v804, %v805
    %v807 = vand.u32 %v806, 4294901760
    %808 = vmatmul.mubr.f32.gmra.mrb[0].mxu0 %v807
    %v809 = vpop.f32.mrb[0].mxu0
    %v810 = vadd.f32 0.0, %v809
    %v811 = vpop.f32.mrb[0].mxu0
    %v812 = vadd.f32 0.0, %v811
    %813 = vdwg.mxu0
    %v814 = vand.u32 %v42, 4294901760
    %v815 = vsub.f32 %v42, %v814
    %v816 = vand.u32 %v815, 4294901760
    %v817 = vsub.f32 %v815, %v816
    %v818 = vand.u32 %v817, 4294901760
    %819 = vmatprep.subr.mxu0 %v818
    %v820 = vand.u32 %v41, 4294901760
    %v821 = vsub.f32 %v41, %v820
    %v822 = vand.u32 %v821, 4294901760
    %v823 = vsub.f32 %v821, %v822
    %v824 = vand.u32 %v823, 4294901760
    %825 = vmatpush1.msra.mxu0 %v824
    %v826 = vand.u32 %v46, 4294901760
    %v827 = vsub.f32 %v46, %v826
    %v828 = vand.u32 %v827, 4294901760
    %v829 = vsub.f32 %v827, %v828
    %v830 = vand.u32 %v829, 4294901760
    %831 = vmatprep.subr.mxu0 %v830
    %v832 = vand.u32 %v45, 4294901760
    %v833 = vsub.f32 %v45, %v832
    %v834 = vand.u32 %v833, 4294901760
    %v835 = vsub.f32 %v833, %v834
    %v836 = vand.u32 %v835, 4294901760
    %837 = vmatpush1.msra.mxu0 %v836
    %v838 = vand.u32 %v50, 4294901760
    %v839 = vsub.f32 %v50, %v838
    %v840 = vand.u32 %v839, 4294901760
    %v841 = vsub.f32 %v839, %v840
    %v842 = vand.u32 %v841, 4294901760
    %843 = vmatprep.subr.mxu0 %v842
    %v844 = vand.u32 %v49, 4294901760
    %v845 = vsub.f32 %v49, %v844
    %v846 = vand.u32 %v845, 4294901760
    %v847 = vsub.f32 %v845, %v846
    %v848 = vand.u32 %v847, 4294901760
    %849 = vmatpush1.msra.mxu0 %v848
    %v850 = vand.u32 %v54, 4294901760
    %v851 = vsub.f32 %v54, %v850
    %v852 = vand.u32 %v851, 4294901760
    %v853 = vsub.f32 %v851, %v852
    %v854 = vand.u32 %v853, 4294901760
    %855 = vmatprep.subr.mxu0 %v854
    %v856 = vand.u32 %v53, 4294901760
    %v857 = vsub.f32 %v53, %v856
    %v858 = vand.u32 %v857, 4294901760
    %v859 = vsub.f32 %v857, %v858
    %v860 = vand.u32 %v859, 4294901760
    %861 = vmatpush1.msra.mxu0 %v860
    %v862 = vand.u32 %v58, 4294901760
    %v863 = vsub.f32 %v58, %v862
    %v864 = vand.u32 %v863, 4294901760
    %v865 = vsub.f32 %v863, %v864
    %v866 = vand.u32 %v865, 4294901760
    %867 = vmatprep.subr.mxu0 %v866
    %v868 = vand.u32 %v57, 4294901760
    %v869 = vsub.f32 %v57, %v868
    %v870 = vand.u32 %v869, 4294901760
    %v871 = vsub.f32 %v869, %v870
    %v872 = vand.u32 %v871, 4294901760
    %873 = vmatpush1.msra.mxu0 %v872
    %v874 = vand.u32 %v62, 4294901760
    %v875 = vsub.f32 %v62, %v874
    %v876 = vand.u32 %v875, 4294901760
    %v877 = vsub.f32 %v875, %v876
    %v878 = vand.u32 %v877, 4294901760
    %879 = vmatprep.subr.mxu0 %v878
    %v880 = vand.u32 %v61, 4294901760
    %v881 = vsub.f32 %v61, %v880
    %v882 = vand.u32 %v881, 4294901760
    %v883 = vsub.f32 %v881, %v882
    %v884 = vand.u32 %v883, 4294901760
    %885 = vmatpush1.msra.mxu0 %v884
    %v886 = vand.u32 %v66, 4294901760
    %v887 = vsub.f32 %v66, %v886
    %v888 = vand.u32 %v887, 4294901760
    %v889 = vsub.f32 %v887, %v888
    %v890 = vand.u32 %v889, 4294901760
    %891 = vmatprep.subr.mxu0 %v890
    %v892 = vand.u32 %v65, 4294901760
    %v893 = vsub.f32 %v65, %v892
    %v894 = vand.u32 %v893, 4294901760
    %v895 = vsub.f32 %v893, %v894
    %v896 = vand.u32 %v895, 4294901760
    %897 = vmatpush1.msra.mxu0 %v896
    %v898 = vand.u32 %v70, 4294901760
    %v899 = vsub.f32 %v70, %v898
    %v900 = vand.u32 %v899, 4294901760
    %v901 = vsub.f32 %v899, %v900
    %v902 = vand.u32 %v901, 4294901760
    %903 = vmatprep.subr.mxu0 %v902
    %v904 = vand.u32 %v69, 4294901760
    %v905 = vsub.f32 %v69, %v904
    %v906 = vand.u32 %v905, 4294901760
    %v907 = vsub.f32 %v905, %v906
    %v908 = vand.u32 %v907, 4294901760
    %909 = vmatpush1.msra.mxu0 %v908
    %910 = vmatprep.subr.mxu0 0.0
    %911 = vmatpush1.msra.mxu0 0.0
    %912 = vmatprep.subr.mxu0 0.0
    %913 = vmatpush1.msra.mxu0 0.0
    %914 = vmatprep.subr.mxu0 0.0
    %915 = vmatpush1.msra.mxu0 0.0
    %916 = vmatprep.subr.mxu0 0.0
    %917 = vmatpush1.msra.mxu0 0.0
    %918 = vmatprep.subr.mxu0 0.0
    %919 = vmatpush1.msra.mxu0 0.0
    %920 = vmatprep.subr.mxu0 0.0
    %921 = vmatpush1.msra.mxu0 0.0
    %922 = vmatprep.subr.mxu0 0.0
    %923 = vmatpush1.msra.mxu0 0.0
    %924 = vmatprep.subr.mxu0 0.0
    %925 = vmatpush1.msra.mxu0 0.0
    %926 = vmatprep.subr.mxu0 0.0
    %927 = vmatpush1.msra.mxu0 0.0
    %928 = vmatprep.subr.mxu0 0.0
    %929 = vmatpush1.msra.mxu0 0.0
    %930 = vmatprep.subr.mxu0 0.0
    %931 = vmatpush1.msra.mxu0 0.0
    %932 = vmatprep.subr.mxu0 0.0
    %933 = vmatpush1.msra.mxu0 0.0
    %934 = vmatprep.subr.mxu0 0.0
    %935 = vmatpush1.msra.mxu0 0.0
    %936 = vmatprep.subr.mxu0 0.0
    %937 = vmatpush1.msra.mxu0 0.0
    %938 = vmatprep.subr.mxu0 0.0
    %939 = vmatpush1.msra.mxu0 0.0
    %940 = vmatprep.subr.mxu0 0.0
    %941 = vmatpush1.msra.mxu0 0.0
    %942 = vmatprep.subr.mxu0 0.0
    %943 = vmatpush1.msra.mxu0 0.0
    %944 = vmatprep.subr.mxu0 0.0
    %945 = vmatpush1.msra.mxu0 0.0
    %946 = vmatprep.subr.mxu0 0.0
    %947 = vmatpush1.msra.mxu0 0.0
    %948 = vmatprep.subr.mxu0 0.0
    %949 = vmatpush1.msra.mxu0 0.0
    %950 = vmatprep.subr.mxu0 0.0
    %951 = vmatpush1.msra.mxu0 0.0
    %952 = vmatprep.subr.mxu0 0.0
    %953 = vmatpush1.msra.mxu0 0.0
    %954 = vmatprep.subr.mxu0 0.0
    %955 = vmatpush1.msra.mxu0 0.0
    %956 = vmatprep.subr.mxu0 0.0
    %957 = vmatpush1.msra.mxu0 0.0
    %958 = vmatprep.mubr.f32.mxu0 0.0
    %v959 = vand.u32 %v73, 4294901760
    %960 = vmatmul.mubr.f32.gmra.mrb[0].mxu0 %v959
    %v961 = vpop.f32.mrb[0].mxu0
    %v962 = vadd.f32 %v810, %v961
    %v963 = vpop.f32.mrb[0].mxu0
    %v964 = vadd.f32 %v812, %v963
    %965 = vdwg.mxu0
    %v966 = vand.u32 %v42, 4294901760
    %v967 = vsub.f32 %v42, %v966
    %968 = vmatprep.subr.mxu0 %v967
    %v969 = vand.u32 %v41, 4294901760
    %v970 = vsub.f32 %v41, %v969
    %971 = vmatpush1.msra.mxu0 %v970
    %v972 = vand.u32 %v46, 4294901760
    %v973 = vsub.f32 %v46, %v972
    %974 = vmatprep.subr.mxu0 %v973
    %v975 = vand.u32 %v45, 4294901760
    %v976 = vsub.f32 %v45, %v975
    %977 = vmatpush1.msra.mxu0 %v976
    %v978 = vand.u32 %v50, 4294901760
    %v979 = vsub.f32 %v50, %v978
    %980 = vmatprep.subr.mxu0 %v979
    %v981 = vand.u32 %v49, 4294901760
    %v982 = vsub.f32 %v49, %v981
    %983 = vmatpush1.msra.mxu0 %v982
    %v984 = vand.u32 %v54, 4294901760
    %v985 = vsub.f32 %v54, %v984
    %986 = vmatprep.subr.mxu0 %v985
    %v987 = vand.u32 %v53, 4294901760
    %v988 = vsub.f32 %v53, %v987
    %989 = vmatpush1.msra.mxu0 %v988
    %v990 = vand.u32 %v58, 4294901760
    %v991 = vsub.f32 %v58, %v990
    %992 = vmatprep.subr.mxu0 %v991
    %v993 = vand.u32 %v57, 4294901760
    %v994 = vsub.f32 %v57, %v993
    %995 = vmatpush1.msra.mxu0 %v994
    %v996 = vand.u32 %v62, 4294901760
    %v997 = vsub.f32 %v62, %v996
    %998 = vmatprep.subr.mxu0 %v997
    %v999 = vand.u32 %v61, 4294901760
    %v1000 = vsub.f32 %v61, %v999
    %1001 = vmatpush1.msra.mxu0 %v1000
    %v1002 = vand.u32 %v66, 4294901760
    %v1003 = vsub.f32 %v66, %v1002
    %1004 = vmatprep.subr.mxu0 %v1003
    %v1005 = vand.u32 %v65, 4294901760
    %v1006 = vsub.f32 %v65, %v1005
    %1007 = vmatpush1.msra.mxu0 %v1006
    %v1008 = vand.u32 %v70, 4294901760
    %v1009 = vsub.f32 %v70, %v1008
    %1010 = vmatprep.subr.mxu0 %v1009
    %v1011 = vand.u32 %v69, 4294901760
    %v1012 = vsub.f32 %v69, %v1011
    %1013 = vmatpush1.msra.mxu0 %v1012
    %1014 = vmatprep.subr.mxu0 0.0
    %1015 = vmatpush1.msra.mxu0 0.0
    %1016 = vmatprep.subr.mxu0 0.0
    %1017 = vmatpush1.msra.mxu0 0.0
    %1018 = vmatprep.subr.mxu0 0.0
    %1019 = vmatpush1.msra.mxu0 0.0
    %1020 = vmatprep.subr.mxu0 0.0
    %1021 = vmatpush1.msra.mxu0 0.0
    %1022 = vmatprep.subr.mxu0 0.0
    %1023 = vmatpush1.msra.mxu0 0.0
    %1024 = vmatprep.subr.mxu0 0.0
    %1025 = vmatpush1.msra.mxu0 0.0
    %1026 = vmatprep.subr.mxu0 0.0
    %1027 = vmatpush1.msra.mxu0 0.0
    %1028 = vmatprep.subr.mxu0 0.0
    %1029 = vmatpush1.msra.mxu0 0.0
    %1030 = vmatprep.subr.mxu0 0.0
    %1031 = vmatpush1.msra.mxu0 0.0
    %1032 = vmatprep.subr.mxu0 0.0
    %1033 = vmatpush1.msra.mxu0 0.0
    %1034 = vmatprep.subr.mxu0 0.0
    %1035 = vmatpush1.msra.mxu0 0.0
    %1036 = vmatprep.subr.mxu0 0.0
    %1037 = vmatpush1.msra.mxu0 0.0
    %1038 = vmatprep.subr.mxu0 0.0
    %1039 = vmatpush1.msra.mxu0 0.0
    %1040 = vmatprep.subr.mxu0 0.0
    %1041 = vmatpush1.msra.mxu0 0.0
    %1042 = vmatprep.subr.mxu0 0.0
    %1043 = vmatpush1.msra.mxu0 0.0
    %1044 = vmatprep.subr.mxu0 0.0
    %1045 = vmatpush1.msra.mxu0 0.0
    %1046 = vmatprep.subr.mxu0 0.0
    %1047 = vmatpush1.msra.mxu0 0.0
    %1048 = vmatprep.subr.mxu0 0.0
    %1049 = vmatpush1.msra.mxu0 0.0
    %1050 = vmatprep.subr.mxu0 0.0
    %1051 = vmatpush1.msra.mxu0 0.0
    %1052 = vmatprep.subr.mxu0 0.0
    %1053 = vmatpush1.msra.mxu0 0.0
    %1054 = vmatprep.subr.mxu0 0.0
    %1055 = vmatpush1.msra.mxu0 0.0
    %1056 = vmatprep.subr.mxu0 0.0
    %1057 = vmatpush1.msra.mxu0 0.0
    %1058 = vmatprep.subr.mxu0 0.0
    %1059 = vmatpush1.msra.mxu0 0.0
    %1060 = vmatprep.subr.mxu0 0.0
    %1061 = vmatpush1.msra.mxu0 0.0
    %1062 = vmatprep.mubr.f32.mxu0 0.0
    %v1063 = vand.u32 %v73, 4294901760
    %v1064 = vsub.f32 %v73, %v1063
    %1065 = vmatmul.mubr.f32.gmra.mrb[0].mxu0 %v1064
    %v1066 = vpop.f32.mrb[0].mxu0
    %v1067 = vadd.f32 %v962, %v1066
    %v1068 = vpop.f32.mrb[0].mxu0
    %v1069 = vadd.f32 %v964, %v1068
    %1070 = vdwg.mxu0
    %v1071 = vand.u32 %v42, 4294901760
    %1072 = vmatprep.subr.mxu0 %v1071
    %v1073 = vand.u32 %v41, 4294901760
    %1074 = vmatpush1.msra.mxu0 %v1073
    %v1075 = vand.u32 %v46, 4294901760
    %1076 = vmatprep.subr.mxu0 %v1075
    %v1077 = vand.u32 %v45, 4294901760
    %1078 = vmatpush1.msra.mxu0 %v1077
    %v1079 = vand.u32 %v50, 4294901760
    %1080 = vmatprep.subr.mxu0 %v1079
    %v1081 = vand.u32 %v49, 4294901760
    %1082 = vmatpush1.msra.mxu0 %v1081
    %v1083 = vand.u32 %v54, 4294901760
    %1084 = vmatprep.subr.mxu0 %v1083
    %v1085 = vand.u32 %v53, 4294901760
    %1086 = vmatpush1.msra.mxu0 %v1085
    %v1087 = vand.u32 %v58, 4294901760
    %1088 = vmatprep.subr.mxu0 %v1087
    %v1089 = vand.u32 %v57, 4294901760
    %1090 = vmatpush1.msra.mxu0 %v1089
    %v1091 = vand.u32 %v62, 4294901760
    %1092 = vmatprep.subr.mxu0 %v1091
    %v1093 = vand.u32 %v61, 4294901760
    %1094 = vmatpush1.msra.mxu0 %v1093
    %v1095 = vand.u32 %v66, 4294901760
    %1096 = vmatprep.subr.mxu0 %v1095
    %v1097 = vand.u32 %v65, 4294901760
    %1098 = vmatpush1.msra.mxu0 %v1097
    %v1099 = vand.u32 %v70, 4294901760
    %1100 = vmatprep.subr.mxu0 %v1099
    %v1101 = vand.u32 %v69, 4294901760
    %1102 = vmatpush1.msra.mxu0 %v1101
    %1103 = vmatprep.subr.mxu0 0.0
    %1104 = vmatpush1.msra.mxu0 0.0
    %1105 = vmatprep.subr.mxu0 0.0
    %1106 = vmatpush1.msra.mxu0 0.0
    %1107 = vmatprep.subr.mxu0 0.0
    %1108 = vmatpush1.msra.mxu0 0.0
    %1109 = vmatprep.subr.mxu0 0.0
    %1110 = vmatpush1.msra.mxu0 0.0
    %1111 = vmatprep.subr.mxu0 0.0
    %1112 = vmatpush1.msra.mxu0 0.0
    %1113 = vmatprep.subr.mxu0 0.0
    %1114 = vmatpush1.msra.mxu0 0.0
    %1115 = vmatprep.subr.mxu0 0.0
    %1116 = vmatpush1.msra.mxu0 0.0
    %1117 = vmatprep.subr.mxu0 0.0
    %1118 = vmatpush1.msra.mxu0 0.0
    %1119 = vmatprep.subr.mxu0 0.0
    %1120 = vmatpush1.msra.mxu0 0.0
    %1121 = vmatprep.subr.mxu0 0.0
    %1122 = vmatpush1.msra.mxu0 0.0
    %1123 = vmatprep.subr.mxu0 0.0
    %1124 = vmatpush1.msra.mxu0 0.0
    %1125 = vmatprep.subr.mxu0 0.0
    %1126 = vmatpush1.msra.mxu0 0.0
    %1127 = vmatprep.subr.mxu0 0.0
    %1128 = vmatpush1.msra.mxu0 0.0
    %1129 = vmatprep.subr.mxu0 0.0
    %1130 = vmatpush1.msra.mxu0 0.0
    %1131 = vmatprep.subr.mxu0 0.0
    %1132 = vmatpush1.msra.mxu0 0.0
    %1133 = vmatprep.subr.mxu0 0.0
    %1134 = vmatpush1.msra.mxu0 0.0
    %1135 = vmatprep.subr.mxu0 0.0
    %1136 = vmatpush1.msra.mxu0 0.0
    %1137 = vmatprep.subr.mxu0 0.0
    %1138 = vmatpush1.msra.mxu0 0.0
    %1139 = vmatprep.subr.mxu0 0.0
    %1140 = vmatpush1.msra.mxu0 0.0
    %1141 = vmatprep.subr.mxu0 0.0
    %1142 = vmatpush1.msra.mxu0 0.0
    %1143 = vmatprep.subr.mxu0 0.0
    %1144 = vmatpush1.msra.mxu0 0.0
    %1145 = vmatprep.subr.mxu0 0.0
    %1146 = vmatpush1.msra.mxu0 0.0
    %1147 = vmatprep.subr.mxu0 0.0
    %1148 = vmatpush1.msra.mxu0 0.0
    %1149 = vmatprep.subr.mxu0 0.0
    %1150 = vmatpush1.msra.mxu0 0.0
    %1151 = vmatprep.mubr.f32.mxu0 0.0
    %v1152 = vand.u32 %v73, 4294901760
    %v1153 = vsub.f32 %v73, %v1152
    %v1154 = vand.u32 %v1153, 4294901760
    %1155 = vmatmul.mubr.f32.gmra.mrb[0].mxu0 %v1154
    %v1156 = vpop.f32.mrb[0].mxu0
    %v1157 = vadd.f32 %v1067, %v1156
    %v1158 = vpop.f32.mrb[0].mxu0
    %v1159 = vadd.f32 %v1069, %v1158
    %1160 = vdwg.mxu0
    %v1161 = vand.u32 %v42, 4294901760
    %v1162 = vsub.f32 %v42, %v1161
    %v1163 = vand.u32 %v1162, 4294901760
    %1164 = vmatprep.subr.mxu0 %v1163
    %v1165 = vand.u32 %v41, 4294901760
    %v1166 = vsub.f32 %v41, %v1165
    %v1167 = vand.u32 %v1166, 4294901760
    %1168 = vmatpush1.msra.mxu0 %v1167
    %v1169 = vand.u32 %v46, 4294901760
    %v1170 = vsub.f32 %v46, %v1169
    %v1171 = vand.u32 %v1170, 4294901760
    %1172 = vmatprep.subr.mxu0 %v1171
    %v1173 = vand.u32 %v45, 4294901760
    %v1174 = vsub.f32 %v45, %v1173
    %v1175 = vand.u32 %v1174, 4294901760
    %1176 = vmatpush1.msra.mxu0 %v1175
    %v1177 = vand.u32 %v50, 4294901760
    %v1178 = vsub.f32 %v50, %v1177
    %v1179 = vand.u32 %v1178, 4294901760
    %1180 = vmatprep.subr.mxu0 %v1179
    %v1181 = vand.u32 %v49, 4294901760
    %v1182 = vsub.f32 %v49, %v1181
    %v1183 = vand.u32 %v1182, 4294901760
    %1184 = vmatpush1.msra.mxu0 %v1183
    %v1185 = vand.u32 %v54, 4294901760
    %v1186 = vsub.f32 %v54, %v1185
    %v1187 = vand.u32 %v1186, 4294901760
    %1188 = vmatprep.subr.mxu0 %v1187
    %v1189 = vand.u32 %v53, 4294901760
    %v1190 = vsub.f32 %v53, %v1189
    %v1191 = vand.u32 %v1190, 4294901760
    %1192 = vmatpush1.msra.mxu0 %v1191
    %v1193 = vand.u32 %v58, 4294901760
    %v1194 = vsub.f32 %v58, %v1193
    %v1195 = vand.u32 %v1194, 4294901760
    %1196 = vmatprep.subr.mxu0 %v1195
    %v1197 = vand.u32 %v57, 4294901760
    %v1198 = vsub.f32 %v57, %v1197
    %v1199 = vand.u32 %v1198, 4294901760
    %1200 = vmatpush1.msra.mxu0 %v1199
    %v1201 = vand.u32 %v62, 4294901760
    %v1202 = vsub.f32 %v62, %v1201
    %v1203 = vand.u32 %v1202, 4294901760
    %1204 = vmatprep.subr.mxu0 %v1203
    %v1205 = vand.u32 %v61, 4294901760
    %v1206 = vsub.f32 %v61, %v1205
    %v1207 = vand.u32 %v1206, 4294901760
    %1208 = vmatpush1.msra.mxu0 %v1207
    %v1209 = vand.u32 %v66, 4294901760
    %v1210 = vsub.f32 %v66, %v1209
    %v1211 = vand.u32 %v1210, 4294901760
    %1212 = vmatprep.subr.mxu0 %v1211
    %v1213 = vand.u32 %v65, 4294901760
    %v1214 = vsub.f32 %v65, %v1213
    %v1215 = vand.u32 %v1214, 4294901760
    %1216 = vmatpush1.msra.mxu0 %v1215
    %v1217 = vand.u32 %v70, 4294901760
    %v1218 = vsub.f32 %v70, %v1217
    %v1219 = vand.u32 %v1218, 4294901760
    %1220 = vmatprep.subr.mxu0 %v1219
    %v1221 = vand.u32 %v69, 4294901760
    %v1222 = vsub.f32 %v69, %v1221
    %v1223 = vand.u32 %v1222, 4294901760
    %1224 = vmatpush1.msra.mxu0 %v1223
    %1225 = vmatprep.subr.mxu0 0.0
    %1226 = vmatpush1.msra.mxu0 0.0
    %1227 = vmatprep.subr.mxu0 0.0
    %1228 = vmatpush1.msra.mxu0 0.0
    %1229 = vmatprep.subr.mxu0 0.0
    %1230 = vmatpush1.msra.mxu0 0.0
    %1231 = vmatprep.subr.mxu0 0.0
    %1232 = vmatpush1.msra.mxu0 0.0
    %1233 = vmatprep.subr.mxu0 0.0
    %1234 = vmatpush1.msra.mxu0 0.0
    %1235 = vmatprep.subr.mxu0 0.0
    %1236 = vmatpush1.msra.mxu0 0.0
    %1237 = vmatprep.subr.mxu0 0.0
    %1238 = vmatpush1.msra.mxu0 0.0
    %1239 = vmatprep.subr.mxu0 0.0
    %1240 = vmatpush1.msra.mxu0 0.0
    %1241 = vmatprep.subr.mxu0 0.0
    %1242 = vmatpush1.msra.mxu0 0.0
    %1243 = vmatprep.subr.mxu0 0.0
    %1244 = vmatpush1.msra.mxu0 0.0
    %1245 = vmatprep.subr.mxu0 0.0
    %1246 = vmatpush1.msra.mxu0 0.0
    %1247 = vmatprep.subr.mxu0 0.0
    %1248 = vmatpush1.msra.mxu0 0.0
    %1249 = vmatprep.subr.mxu0 0.0
    %1250 = vmatpush1.msra.mxu0 0.0
    %1251 = vmatprep.subr.mxu0 0.0
    %1252 = vmatpush1.msra.mxu0 0.0
    %1253 = vmatprep.subr.mxu0 0.0
    %1254 = vmatpush1.msra.mxu0 0.0
    %1255 = vmatprep.subr.mxu0 0.0
    %1256 = vmatpush1.msra.mxu0 0.0
    %1257 = vmatprep.subr.mxu0 0.0
    %1258 = vmatpush1.msra.mxu0 0.0
    %1259 = vmatprep.subr.mxu0 0.0
    %1260 = vmatpush1.msra.mxu0 0.0
    %1261 = vmatprep.subr.mxu0 0.0
    %1262 = vmatpush1.msra.mxu0 0.0
    %1263 = vmatprep.subr.mxu0 0.0
    %1264 = vmatpush1.msra.mxu0 0.0
    %1265 = vmatprep.subr.mxu0 0.0
    %1266 = vmatpush1.msra.mxu0 0.0
    %1267 = vmatprep.subr.mxu0 0.0
    %1268 = vmatpush1.msra.mxu0 0.0
    %1269 = vmatprep.subr.mxu0 0.0
    %1270 = vmatpush1.msra.mxu0 0.0
    %1271 = vmatprep.subr.mxu0 0.0
    %1272 = vmatpush1.msra.mxu0 0.0
    %1273 = vmatprep.mubr.f32.mxu0 0.0
    %v1274 = vand.u32 %v73, 4294901760
    %1275 = vmatmul.mubr.f32.gmra.mrb[0].mxu0 %v1274
    %v1276 = vpop.f32.mrb[0].mxu0
    %v1277 = vadd.f32 %v1157, %v1276
    %v1278 = vpop.f32.mrb[0].mxu0
    %v1279 = vadd.f32 %v1159, %v1278
    %1280 = vdwg.mxu0
    %v1281 = vand.u32 %v42, 4294901760
    %1282 = vmatprep.subr.mxu0 %v1281
    %v1283 = vand.u32 %v41, 4294901760
    %1284 = vmatpush1.msra.mxu0 %v1283
    %v1285 = vand.u32 %v46, 4294901760
    %1286 = vmatprep.subr.mxu0 %v1285
    %v1287 = vand.u32 %v45, 4294901760
    %1288 = vmatpush1.msra.mxu0 %v1287
    %v1289 = vand.u32 %v50, 4294901760
    %1290 = vmatprep.subr.mxu0 %v1289
    %v1291 = vand.u32 %v49, 4294901760
    %1292 = vmatpush1.msra.mxu0 %v1291
    %v1293 = vand.u32 %v54, 4294901760
    %1294 = vmatprep.subr.mxu0 %v1293
    %v1295 = vand.u32 %v53, 4294901760
    %1296 = vmatpush1.msra.mxu0 %v1295
    %v1297 = vand.u32 %v58, 4294901760
    %1298 = vmatprep.subr.mxu0 %v1297
    %v1299 = vand.u32 %v57, 4294901760
    %1300 = vmatpush1.msra.mxu0 %v1299
    %v1301 = vand.u32 %v62, 4294901760
    %1302 = vmatprep.subr.mxu0 %v1301
    %v1303 = vand.u32 %v61, 4294901760
    %1304 = vmatpush1.msra.mxu0 %v1303
    %v1305 = vand.u32 %v66, 4294901760
    %1306 = vmatprep.subr.mxu0 %v1305
    %v1307 = vand.u32 %v65, 4294901760
    %1308 = vmatpush1.msra.mxu0 %v1307
    %v1309 = vand.u32 %v70, 4294901760
    %1310 = vmatprep.subr.mxu0 %v1309
    %v1311 = vand.u32 %v69, 4294901760
    %1312 = vmatpush1.msra.mxu0 %v1311
    %1313 = vmatprep.subr.mxu0 0.0
    %1314 = vmatpush1.msra.mxu0 0.0
    %1315 = vmatprep.subr.mxu0 0.0
    %1316 = vmatpush1.msra.mxu0 0.0
    %1317 = vmatprep.subr.mxu0 0.0
    %1318 = vmatpush1.msra.mxu0 0.0
    %1319 = vmatprep.subr.mxu0 0.0
    %1320 = vmatpush1.msra.mxu0 0.0
    %1321 = vmatprep.subr.mxu0 0.0
    %1322 = vmatpush1.msra.mxu0 0.0
    %1323 = vmatprep.subr.mxu0 0.0
    %1324 = vmatpush1.msra.mxu0 0.0
    %1325 = vmatprep.subr.mxu0 0.0
    %1326 = vmatpush1.msra.mxu0 0.0
    %1327 = vmatprep.subr.mxu0 0.0
    %1328 = vmatpush1.msra.mxu0 0.0
    %1329 = vmatprep.subr.mxu0 0.0
    %1330 = vmatpush1.msra.mxu0 0.0
    %1331 = vmatprep.subr.mxu0 0.0
    %1332 = vmatpush1.msra.mxu0 0.0
    %1333 = vmatprep.subr.mxu0 0.0
    %1334 = vmatpush1.msra.mxu0 0.0
    %1335 = vmatprep.subr.mxu0 0.0
    %1336 = vmatpush1.msra.mxu0 0.0
    %1337 = vmatprep.subr.mxu0 0.0
    %1338 = vmatpush1.msra.mxu0 0.0
    %1339 = vmatprep.subr.mxu0 0.0
    %1340 = vmatpush1.msra.mxu0 0.0
    %1341 = vmatprep.subr.mxu0 0.0
    %1342 = vmatpush1.msra.mxu0 0.0
    %1343 = vmatprep.subr.mxu0 0.0
    %1344 = vmatpush1.msra.mxu0 0.0
    %1345 = vmatprep.subr.mxu0 0.0
    %1346 = vmatpush1.msra.mxu0 0.0
    %1347 = vmatprep.subr.mxu0 0.0
    %1348 = vmatpush1.msra.mxu0 0.0
    %1349 = vmatprep.subr.mxu0 0.0
    %1350 = vmatpush1.msra.mxu0 0.0
    %1351 = vmatprep.subr.mxu0 0.0
    %1352 = vmatpush1.msra.mxu0 0.0
    %1353 = vmatprep.subr.mxu0 0.0
    %1354 = vmatpush1.msra.mxu0 0.0
    %1355 = vmatprep.subr.mxu0 0.0
    %1356 = vmatpush1.msra.mxu0 0.0
    %1357 = vmatprep.subr.mxu0 0.0
    %1358 = vmatpush1.msra.mxu0 0.0
    %1359 = vmatprep.subr.mxu0 0.0
    %1360 = vmatpush1.msra.mxu0 0.0
    %1361 = vmatprep.mubr.f32.mxu0 0.0
    %v1362 = vand.u32 %v73, 4294901760
    %1363 = vmatmul.mubr.f32.gmra.mrb[0].mxu0 %v1362
    %v1364 = vpop.f32.mrb[0].mxu0
    %v1365 = vadd.f32 %v1277, %v1364
    %v1366 = vpop.f32.mrb[0].mxu0
    %v1367 = vadd.f32 %v1279, %v1366
    %1368 = vdwg.mxu0
    %v1373 = vcombine.low %v718, %v720
    %v1374 = vcombine.low %v1365, %v1367
    %v1376 = vunpack.c.l.s4 1966171168
    %v1377 = vunpack.c.0.s8 %v1376
    %v1378 = vlaneseq
    %v1379 = vshrl.u32 %v1378, 7
    %v1380 = vsub.s32 %v1377, %v1379
    %v1381 = vrot.slane %v1373, %v1380
    %v1383 = vunpack.c.l.s4 1966171168
    %v1384 = vunpack.c.0.s8 %v1383
    %v1385 = vlaneseq
    %v1386 = vshrl.u32 %v1385, 7
    %v1387 = vsub.s32 %v1384, %v1386
    %v1388 = vrot.slane %v1374, %v1387
    %v1389 = vcombine.low %v1381, %v1388
    %v1391 = vunpack.c.l.s4 1966171168
    %v1392 = vunpack.c.0.s8 %v1391
    %v1393 = vlaneseq
    %v1394 = vshrl.u32 %v1393, 7
    %v1395 = vsub.s32 %v1392, %v1394
    %v1396 = vrot.slane %v1389, %v1395
    %v1398 = vlaneseq
    %vm1399 = vcmp.ge.s32.totalorder %v1398, 0
    %vm1400 = vcmp.lt.s32.totalorder %v1398, 512
    %vm1401 = vmand %vm1399, %vm1400
    %1402 = vst.msk [vmem:[#allocation7] sm:$0xf] %vm1401, %v1396
    // Predicated region
    $region18: #{tpu_custom_call.1} parent=1 // pred_check
      _
    $region19: #{tpu_custom_call.1} parent=1 // pred_check_branch
      %1404 = sbr.rel (0) target = $region21
    $region20: #{tpu_custom_call.1} parent=1 // pred_region
      %s1406 = ssub.s32 64, 64
      %1407 = vsyncadd [#allocation4], %s1406
      %s1409 = sshll.u32 [#allocation7], 4
      %s1410 = int_to_ptr.vmem [resolvable:$true] %s1409
      %1412 = dma.vmem_to_hbm [thread:$0]  %s1410, 64, %s2, [#allocation4]
    $region21: #{tpu_custom_call.1} parent=1 // pred_fallthru
      _
    // Predicated region
    $region22: #{tpu_custom_call.1} parent=1 // pred_check
      _
    $region23: #{tpu_custom_call.1} parent=1 // pred_check_branch
      %1414 = sbr.rel (0) target = $region25
    $region24: #{tpu_custom_call.1} parent=1 // pred_region
      %1415 = dma.done [#allocation4], 64
    $region25: #{tpu_custom_call.1} parent=1 // pred_fallthru
      _
    %1416 = vsyncpa [#allocation3], 1
    %1417 = vsyncpa [#allocation6], 1
    %1418 = vsyncpa [#allocation4], 1

</llo_original>
